<compile_context>
chip_gen: v7x
topology: tpu7x:2x2x1
jax: 0.10.0
libtpu: 0.0.40
codegen_flags: <defaults>
</compile_context>

<pallas_src>
import math

import jax
import jax.numpy as jnp
from jax.experimental import pallas as pl
from jax.experimental.pallas import tpu as pltpu


def _round_up(x, m):
    return ((x + m - 1) // m) * m


def _sigmoid_via_tanh(x):
    # sigmoid(x) == 0.5 * (tanh(0.5 * x) + 1): single EUP push vs exp + recip.
    return 0.5 * (jnp.tanh(0.5 * x) + 1.0)


def _gru_cell_kernel(x_ref, h_ref, wi_ref, wh_ref, bi_ref, bh_ref, out_ref):
    """One batch tile of the GRU cell.

    x_ref : (TB, I)      matmul dtype, streamed per batch tile
    h_ref : (TB, HP)     f32, single transfer (matmul operand AND blend term)
    wi_ref: (I,  3*HP)   matmul dtype, VMEM-resident (constant index_map)
    wh_ref: (HP, 3*HP)   matmul dtype, VMEM-resident
    bi_ref: (1,  3*HP)   f32: [b_ir | b_iz | b_in]
    bh_ref: (1,  3*HP)   f32: [b_hr | b_hz | b_hn]
    out_ref: (TB, HP)    final dtype (lane-dense store)
    """
    hp = h_ref.shape[-1]
    h = h_ref[...]

    # Two MXU matmuls over the real 3*HP gate width (no zero-padded columns),
    # f32 accumulation, one broadcast bias add each.
    gi = jnp.dot(x_ref[...], wi_ref[...],
                 preferred_element_type=jnp.float32) + bi_ref[...]
    gh = jnp.dot(h.astype(wh_ref.dtype), wh_ref[...],
                 preferred_element_type=jnp.float32) + bh_ref[...]

    # Gate-major, 128-aligned column slices => free static views.
    r_t = _sigmoid_via_tanh(gi[:, 0:hp] + gh[:, 0:hp])
    z_t = _sigmoid_via_tanh(gi[:, hp:2 * hp] + gh[:, hp:2 * hp])
    # n_t = tanh(r_t * (w_hn + b_hn) + (w_in + b_in)); b_in stays OUTSIDE r_t*,
    # b_hn stays INSIDE, exactly matching the PyTorch formula.
    n_t = jnp.tanh(r_t * gh[:, 2 * hp:3 * hp] + gi[:, 2 * hp:3 * hp])

    # n_t + z_t * (h - n_t)  ==  (1 - z_t) * n_t + z_t * h
    out_ref[...] = (n_t + z_t * (h - n_t)).astype(out_ref.dtype)


def pack_gru_cell_params(w_ih, w_hh, b_ih, b_hh, *, matmul_dtype=jnp.bfloat16):
    """Pre-pack weights/biases (hoisted off the per-call path).

    Gate-major, HP = round_up(H, 128) padded columns:
      cols [0:HP)    -> r-gate,  cols [HP:2HP) -> z-gate,  cols [2HP:3HP) -> n-gate.
    The x-part and h-part of the n-gate live in Wi/bi and Wh/bh respectively so
    the reset gate multiplies only the h-part.
    """
    three_h, I = w_ih.shape
    H = three_h // 3
    HP = _round_up(H, 128)
    f32 = jnp.float32

    wih_t = w_ih.astype(f32).T      # (I, 3H)
    whh_t = w_hh.astype(f32).T      # (H, 3H)

    # NOTE: the contraction dims (I for x, H->HP for h) are left at / padded to
    # their natural sizes; x keeps its full-dim last axis so its HBM DMA stays
    # dense (padding I to 128 would only inflate x traffic).
    Wi = jnp.zeros((I, 3 * HP), f32)
    Wi = Wi.at[:, 0:H].set(wih_t[:, 0:H])                       # r (x part)
    Wi = Wi.at[:, HP:HP + H].set(wih_t[:, H:2 * H])             # z (x part)
    Wi = Wi.at[:, 2 * HP:2 * HP + H].set(wih_t[:, 2 * H:])      # n (x part)

    Wh = jnp.zeros((HP, 3 * HP), f32)
    Wh = Wh.at[:H, 0:H].set(whh_t[:, 0:H])                      # r (h part)
    Wh = Wh.at[:H, HP:HP + H].set(whh_t[:, H:2 * H])            # z (h part)
    Wh = Wh.at[:H, 2 * HP:2 * HP + H].set(whh_t[:, 2 * H:])     # n (h part)

    b_i = b_ih.astype(f32)[:, 0]
    b_h = b_hh.astype(f32)[:, 0]
    bi = jnp.zeros((1, 3 * HP), f32)
    bi = bi.at[0, 0:H].set(b_i[0:H])
    bi = bi.at[0, HP:HP + H].set(b_i[H:2 * H])
    bi = bi.at[0, 2 * HP:2 * HP + H].set(b_i[2 * H:])
    bh = jnp.zeros((1, 3 * HP), f32)
    bh = bh.at[0, 0:H].set(b_h[0:H])
    bh = bh.at[0, HP:HP + H].set(b_h[H:2 * H])
    bh = bh.at[0, 2 * HP:2 * HP + H].set(b_h[2 * H:])

    return {
        "Wi": Wi.astype(matmul_dtype), "Wh": Wh.astype(matmul_dtype),
        "bi": bi, "bh": bh,
        "I": I, "H": H, "HP": HP, "matmul_dtype": matmul_dtype,
    }


def _vmem_limit_bytes(I, HP, TB, mm_itemsize, out_itemsize):
    """Per-generation VMEM request: residents once, streaming tiles doubled."""
    resident = (I * 3 * HP + HP * 3 * HP) * mm_itemsize + 2 * 3 * HP * 4
    stream = TB * I * mm_itemsize + TB * HP * 4 + TB * HP * out_itemsize
    scratch = 2 * TB * 3 * HP * 4          # gi/gh live intermediates
    need = resident + 2 * stream + scratch + (4 << 20)
    try:
        vmem_cap = pltpu.get_tpu_info().vmem_capacity_bytes
    except Exception:
        vmem_cap = 64 << 20
    # Leave headroom under physical VMEM for Mosaic internal scratch/semaphores.
    hard_cap = (100 << 20) if vmem_cap >= (96 << 20) else (52 << 20)
    return int(min(max(need, 32 << 20), hard_cap))


def gru_cell_v2_packed(x, h, params, *, tile_b=256):
    """GRU cell forward with pre-packed params.  Returns h_t: (B, H)."""
    B, I = x.shape
    H, HP = params["H"], params["HP"]
    mm_dtype = params["matmul_dtype"]
    out_dtype = x.dtype
    f32 = jnp.float32

    # Batch tile: multiple of 16 sublanes (bf16 packing); prefer >= 2 grid
    # steps when B allows so both v7x TensorCores get work.
    TB = min(tile_b, _round_up(B, 16))
    if B > 16 and pl.cdiv(B, TB) < 2:
        TB = _round_up(pl.cdiv(B, 2), 16)
    BP = pl.cdiv(B, TB) * TB

    x_p = jnp.pad(x, ((0, BP - B), (0, 0))).astype(mm_dtype)
    # h shipped ONCE (f32, padded to HP for lane-aligned gates/output).
    h_p = jnp.pad(h.astype(f32), ((0, BP - B), (0, HP - H)))

    vmem_limit = _vmem_limit_bytes(I, HP, TB,
                                   jnp.dtype(mm_dtype).itemsize,
                                   jnp.dtype(out_dtype).itemsize)

    out = pl.pallas_call(
        _gru_cell_kernel,
        out_shape=jax.ShapeDtypeStruct((BP, HP), out_dtype),
        grid_spec=pltpu.PrefetchScalarGridSpec(
            num_scalar_prefetch=0,
            grid=(BP // TB,),
            in_specs=[
                pl.BlockSpec((TB, I), lambda b: (b, 0)),          # x, streamed
                pl.BlockSpec((TB, HP), lambda b: (b, 0)),         # h, streamed
                pl.BlockSpec((I, 3 * HP), lambda b: (0, 0)),      # Wi, resident
                pl.BlockSpec((HP, 3 * HP), lambda b: (0, 0)),     # Wh, resident
                pl.BlockSpec((1, 3 * HP), lambda b: (0, 0)),      # bi, resident
                pl.BlockSpec((1, 3 * HP), lambda b: (0, 0)),      # bh, resident
            ],
            out_specs=pl.BlockSpec((TB, HP), lambda b: (b, 0)),
        ),
        compiler_params=pltpu.CompilerParams(
            dimension_semantics=("parallel",),
            vmem_limit_bytes=vmem_limit,
        ),
    )(x_p, h_p, params["Wi"], params["Wh"], params["bi"], params["bh"])

    return out[:B, :H]


def gru_cell_v2(x, h, w_ih, w_hh, b_ih, b_hh, *,
                matmul_dtype=jnp.bfloat16, tile_b=256):
    """Convenience one-shot wrapper (packs params, then calls the kernel)."""
    params = pack_gru_cell_params(w_ih, w_hh, b_ih, b_hh,
                                  matmul_dtype=matmul_dtype)
    return gru_cell_v2_packed(x, h, params, tile_b=tile_b)


def gru_cell_v2_ref(x, h, w_ih, w_hh, b_ih, b_hh, matmul_dtype=jnp.float32):
    """Plain-JAX reference mirroring the PyTorch forward exactly."""
    gi = jnp.dot(x.astype(matmul_dtype), w_ih.T.astype(matmul_dtype),
                 preferred_element_type=jnp.float32)
    gh = jnp.dot(h.astype(matmul_dtype), w_hh.T.astype(matmul_dtype),
                 preferred_element_type=jnp.float32)
    H = h.shape[1]
    w_ir, w_iz, w_in = gi[:, :H], gi[:, H:2 * H], gi[:, 2 * H:]
    w_hr, w_hz, w_hn = gh[:, :H], gh[:, H:2 * H], gh[:, 2 * H:]
    b_ir, b_iz, b_in = b_ih[:H, 0], b_ih[H:2 * H, 0], b_ih[2 * H:, 0]
    b_hr, b_hz, b_hn = b_hh[:H, 0], b_hh[H:2 * H, 0], b_hh[2 * H:, 0]
    r_t = jax.nn.sigmoid(w_hr + b_hr + w_ir + b_ir)
    z_t = jax.nn.sigmoid(w_hz + b_hz + w_iz + b_iz)
    n_t = jnp.tanh(r_t * (w_hn + b_hn) + w_in + b_in)
    return n_t + z_t * (h - n_t)


if __name__ == "__main__":
    input_size = 16
    hidden_size = 32
    batch = 8

    key = jax.random.PRNGKey(0)
    k_wih, k_whh, k_bih, k_bhh, k_x, k_h = jax.random.split(key, 6)

    # Deterministic init matching the module: uniform in [-K, K], K = 1/sqrt(H).
    K = 1.0 / math.sqrt(hidden_size)
    w_ih = jax.random.uniform(k_wih, (3 * hidden_size, input_size),
                              jnp.float32, minval=-K, maxval=K)
    w_hh = jax.random.uniform(k_whh, (3 * hidden_size, hidden_size),
                              jnp.float32, minval=-K, maxval=K)
    b_ih = jax.random.uniform(k_bih, (3 * hidden_size, 1),
                              jnp.float32, minval=-K, maxval=K)
    b_hh = jax.random.uniform(k_bhh, (3 * hidden_size, 1),
                              jnp.float32, minval=-K, maxval=K)

    x = jax.random.normal(k_x, (batch, input_size), jnp.float32)
    h = jax.random.normal(k_h, (batch, hidden_size), jnp.float32)

    # Pack once (off the per-call path), then run the kernel.
    params = pack_gru_cell_params(w_ih, w_hh, b_ih, b_hh)
    out = gru_cell_v2_packed(x, h, params)
    out = jax.block_until_ready(out)
    assert out.shape == (batch, hidden_size)
    assert out.dtype == x.dtype

    # Tight check vs a reference that mirrors the kernel's bf16 matmul inputs.
    ref_bf16 = gru_cell_v2_ref(x, h, w_ih, w_hh, b_ih, b_hh,
                               matmul_dtype=jnp.bfloat16)
    assert jnp.allclose(out, ref_bf16, atol=2e-3, rtol=2e-3)

    # Loose sanity check vs the pure-f32 PyTorch-parity reference.
    ref_f32 = gru_cell_v2_ref(x, h, w_ih, w_hh, b_ih, b_hh)
    assert jnp.allclose(out, ref_f32, atol=1e-1, rtol=1e-1)

    print("KERNEL_OK")
</pallas_src>

<mosaic_0001>
module attributes {stable_mosaic.version = 11 : i64} {
  func.func @_gru_cell_kernel(%arg0: i32, %arg1: memref<16x16xbf16, #tpu.memory_space<vmem>>, %arg2: memref<16x128xf32, #tpu.memory_space<vmem>>, %arg3: memref<16x384xbf16, #tpu.memory_space<vmem>>, %arg4: memref<128x384xbf16, #tpu.memory_space<vmem>>, %arg5: memref<1x384xf32, #tpu.memory_space<vmem>>, %arg6: memref<1x384xf32, #tpu.memory_space<vmem>>, %arg7: memref<16x128xf32, #tpu.memory_space<vmem>>) attributes {dimension_semantics = [#tpu.dimension_semantics<parallel>], iteration_bounds = array<i64: 1>, scalar_prefetch = 0 : i64, scratch_operands = 0 : i64, tpu.core_type = #tpu.core_type<tc>, window_params = [{transform_indices = @transform_0, window_bounds = array<i64: 16, 16>}, {transform_indices = @transform_1, window_bounds = array<i64: 16, 128>}, {pipeline_mode = #tpu.pipeline_mode<synchronous>, transform_indices = @transform_2, window_bounds = array<i64: 16, 384>}, {pipeline_mode = #tpu.pipeline_mode<synchronous>, transform_indices = @transform_3, window_bounds = array<i64: 128, 384>}, {pipeline_mode = #tpu.pipeline_mode<synchronous>, transform_indices = @transform_4, window_bounds = array<i64: 1, 384>}, {pipeline_mode = #tpu.pipeline_mode<synchronous>, transform_indices = @transform_5, window_bounds = array<i64: 1, 384>}, {transform_indices = @transform_6, window_bounds = array<i64: 16, 128>}]} {
    %c0 = arith.constant 0 : index
    %c0_0 = arith.constant 0 : index
    %0 = vector.load %arg2[%c0, %c0_0] : memref<16x128xf32, #tpu.memory_space<vmem>>, vector<16x128xf32>
    %c0_1 = arith.constant 0 : index
    %c0_2 = arith.constant 0 : index
    %1 = vector.load %arg1[%c0_1, %c0_2] : memref<16x16xbf16, #tpu.memory_space<vmem>>, vector<16x16xbf16>
    %c0_3 = arith.constant 0 : index
    %c0_4 = arith.constant 0 : index
    %2 = vector.load %arg3[%c0_3, %c0_4] : memref<16x384xbf16, #tpu.memory_space<vmem>>, vector<16x384xbf16>
    %cst = arith.constant dense<0.000000e+00> : vector<16x384xf32>
    %3 = tpu.matmul %1, %2, %cst {dimension_numbers = #tpu.dot_dimension_numbers<[1], [0], [0], [1], [0, 0, 1, 1], [], []>} : vector<16x16xbf16>, vector<16x384xbf16>, vector<16x384xf32> -> vector<16x384xf32>
    %c0_5 = arith.constant 0 : index
    %c0_6 = arith.constant 0 : index
    %4 = vector.load %arg5[%c0_5, %c0_6] : memref<1x384xf32, #tpu.memory_space<vmem>>, vector<1x384xf32>
    %5 = vector.broadcast %4 : vector<1x384xf32> to vector<16x384xf32>
    %6 = arith.addf %3, %5 : vector<16x384xf32>
    %7 = arith.truncf %0 : vector<16x128xf32> to vector<16x128xbf16>
    %c0_7 = arith.constant 0 : index
    %c0_8 = arith.constant 0 : index
    %8 = vector.load %arg4[%c0_7, %c0_8] : memref<128x384xbf16, #tpu.memory_space<vmem>>, vector<128x384xbf16>
    %cst_9 = arith.constant dense<0.000000e+00> : vector<16x384xf32>
    %9 = tpu.matmul %7, %8, %cst_9 {dimension_numbers = #tpu.dot_dimension_numbers<[1], [0], [0], [1], [0, 0, 1, 1], [], []>} : vector<16x128xbf16>, vector<128x384xbf16>, vector<16x384xf32> -> vector<16x384xf32>
    %c0_10 = arith.constant 0 : index
    %c0_11 = arith.constant 0 : index
    %10 = vector.load %arg6[%c0_10, %c0_11] : memref<1x384xf32, #tpu.memory_space<vmem>>, vector<1x384xf32>
    %11 = vector.broadcast %10 : vector<1x384xf32> to vector<16x384xf32>
    %12 = arith.addf %9, %11 : vector<16x384xf32>
    %13 = vector.extract_strided_slice %6 {offsets = [0, 0], sizes = [16, 128], strides = [1, 1]} : vector<16x384xf32> to vector<16x128xf32>
    %14 = vector.extract_strided_slice %12 {offsets = [0, 0], sizes = [16, 128], strides = [1, 1]} : vector<16x384xf32> to vector<16x128xf32>
    %15 = arith.addf %13, %14 : vector<16x128xf32>
    %cst_12 = arith.constant 5.000000e-01 : f32
    %16 = vector.broadcast %cst_12 : f32 to vector<16x128xf32>
    %17 = arith.mulf %16, %15 : vector<16x128xf32>
    %18 = math.tanh %17 : vector<16x128xf32>
    %cst_13 = arith.constant 1.000000e+00 : f32
    %19 = vector.broadcast %cst_13 : f32 to vector<16x128xf32>
    %20 = arith.addf %18, %19 : vector<16x128xf32>
    %cst_14 = arith.constant 5.000000e-01 : f32
    %21 = vector.broadcast %cst_14 : f32 to vector<16x128xf32>
    %22 = arith.mulf %21, %20 : vector<16x128xf32>
    %23 = vector.extract_strided_slice %6 {offsets = [0, 128], sizes = [16, 128], strides = [1, 1]} : vector<16x384xf32> to vector<16x128xf32>
    %24 = vector.extract_strided_slice %12 {offsets = [0, 128], sizes = [16, 128], strides = [1, 1]} : vector<16x384xf32> to vector<16x128xf32>
    %25 = arith.addf %23, %24 : vector<16x128xf32>
    %cst_15 = arith.constant 5.000000e-01 : f32
    %26 = vector.broadcast %cst_15 : f32 to vector<16x128xf32>
    %27 = arith.mulf %26, %25 : vector<16x128xf32>
    %28 = math.tanh %27 : vector<16x128xf32>
    %cst_16 = arith.constant 1.000000e+00 : f32
    %29 = vector.broadcast %cst_16 : f32 to vector<16x128xf32>
    %30 = arith.addf %28, %29 : vector<16x128xf32>
    %cst_17 = arith.constant 5.000000e-01 : f32
    %31 = vector.broadcast %cst_17 : f32 to vector<16x128xf32>
    %32 = arith.mulf %31, %30 : vector<16x128xf32>
    %33 = vector.extract_strided_slice %12 {offsets = [0, 256], sizes = [16, 128], strides = [1, 1]} : vector<16x384xf32> to vector<16x128xf32>
    %34 = arith.mulf %22, %33 : vector<16x128xf32>
    %35 = vector.extract_strided_slice %6 {offsets = [0, 256], sizes = [16, 128], strides = [1, 1]} : vector<16x384xf32> to vector<16x128xf32>
    %36 = arith.addf %34, %35 : vector<16x128xf32>
    %37 = math.tanh %36 : vector<16x128xf32>
    %38 = arith.subf %0, %37 : vector<16x128xf32>
    %39 = arith.mulf %32, %38 : vector<16x128xf32>
    %40 = arith.addf %37, %39 : vector<16x128xf32>
    %c0_18 = arith.constant 0 : index
    %c0_19 = arith.constant 0 : index
    %41 = vector.load %arg7[%c0_18, %c0_19] : memref<16x128xf32, #tpu.memory_space<vmem>>, vector<16x128xf32>
    tpu.vector_store %arg7[%c0_18, %c0_19], %40 {strides = array<i32>} : memref<16x128xf32, #tpu.memory_space<vmem>>, vector<16x128xf32>,
    return
  }
  func.func @transform_0(%arg0: i32) -> (i32, i32) {
    %c0_i32 = arith.constant 0 : i32
    %c0_i32_0 = arith.constant 0 : i32
    return %arg0, %c0_i32 : i32, i32
  }
  func.func @transform_1(%arg0: i32) -> (i32, i32) {
    %c0_i32 = arith.constant 0 : i32
    %c0_i32_0 = arith.constant 0 : i32
    return %arg0, %c0_i32 : i32, i32
  }
  func.func @transform_2(%arg0: i32) -> (i32, i32) {
    %c0_i32 = arith.constant 0 : i32
    %c0_i32_0 = arith.constant 0 : i32
    %c0_i32_1 = arith.constant 0 : i32
    return %c0_i32, %c0_i32_0 : i32, i32
  }
  func.func @transform_3(%arg0: i32) -> (i32, i32) {
    %c0_i32 = arith.constant 0 : i32
    %c0_i32_0 = arith.constant 0 : i32
    %c0_i32_1 = arith.constant 0 : i32
    return %c0_i32, %c0_i32_0 : i32, i32
  }
  func.func @transform_4(%arg0: i32) -> (i32, i32) {
    %c0_i32 = arith.constant 0 : i32
    %c0_i32_0 = arith.constant 0 : i32
    %c0_i32_1 = arith.constant 0 : i32
    return %c0_i32, %c0_i32_0 : i32, i32
  }
  func.func @transform_5(%arg0: i32) -> (i32, i32) {
    %c0_i32 = arith.constant 0 : i32
    %c0_i32_0 = arith.constant 0 : i32
    %c0_i32_1 = arith.constant 0 : i32
    return %c0_i32, %c0_i32_0 : i32, i32
  }
  func.func @transform_6(%arg0: i32) -> (i32, i32) {
    %c0_i32 = arith.constant 0 : i32
    %c0_i32_0 = arith.constant 0 : i32
    return %arg0, %c0_i32 : i32, i32
  }
}

</mosaic_0001>

<llo_original>
// kernel: tpu_custom_call.1
$region0: #{tpu_custom_call.1}
  #allocation0 [shape = 'u32[]', space=smem, size = 0x4, offset = 0x4, fixed_abs, tag = 'smem constant byte address 0x4 - core index']
  #allocation1 [shape = 'u32[144,128]{1,0:T(1,128)}', space=vmem, size = 0x12000, scoped, tag = 'internal scratch']
  %s0 = inlined_call_operand.hbm [shape: bf16[16,16], index: 0, kind: input, shape index: {}]
  %s1 = inlined_call_operand.hbm [shape: f32[16,128], index: 1, kind: input, shape index: {}]
  %s2 = inlined_call_operand.hbm [shape: bf16[16,384], index: 2, kind: input, shape index: {}]
  %s3 = inlined_call_operand.hbm [shape: bf16[128,384], index: 3, kind: input, shape index: {}]
  %s4 = inlined_call_operand.vmem [shape: f32[1,384], index: 4, kind: input, shape index: {}]
  %s5 = inlined_call_operand.vmem [shape: f32[1,384], index: 5, kind: input, shape index: {}]
  %s6 = inlined_call_operand.hbm [shape: f32[16,128], index: 6, kind: output, shape index: {}]
  %s7 = sld [smem:[#allocation0]]
  $region50: #{tpu_custom_call.1} parent=0
    _
  %s9 = ssub.s32 1, %s7
  %s10 = scalar_select 0, %s9, %s7
  $region1: #{tpu_custom_call.1} parent=0
    #allocation2 [shape = 'u8[4096]{0}', space=vmem, size = 0x1000, scoped, tag = 'input window, operand 0, single buffered']
    #allocation3 [shape = 's32[1]{0}', space=sflag, size = 0x4, scoped, tag = 'scoped memory for tpu_custom_call.1']
    #allocation4 [shape = 's32[1]{0}', space=sflag, size = 0x4, scoped, tag = 'scoped memory for tpu_custom_call.1']
    #allocation5 [shape = 'u8[8192]{0}', space=vmem, size = 0x2000, scoped, tag = 'input window, operand 1, single buffered']
    #allocation6 [shape = 's32[1]{0}', space=sflag, size = 0x4, scoped, tag = 'scoped memory for tpu_custom_call.1']
    #allocation7 [shape = 'u8[12288]{0}', space=vmem, size = 0x3000, scoped, tag = 'input window, operand 2, single buffered']
    #allocation8 [shape = 'u8[98304]{0}', space=vmem, size = 0x18000, scoped, tag = 'input window, operand 3, single buffered']
    #allocation9 [shape = 's32[1]{0}', space=sflag, size = 0x4, scoped, tag = 'scoped memory for tpu_custom_call.1']
    #allocation10 [shape = 'u8[8192]{0}', space=vmem, size = 0x2000, scoped, tag = 'output window, operand 0, single buffered']
    %11 = vsyncpa [#allocation3], 0
    %12 = vsyncpa [#allocation6], 0
    %13 = vsyncpa [#allocation9], 0
    %14 = vsyncpa [#allocation4], 0
    // Predicated region
    $region2: #{tpu_custom_call.1} parent=1 // pred_check
      _
    $region3: #{tpu_custom_call.1} parent=1 // pred_check_branch
      %16 = sbr.rel (0) target = $region5
    $region4: #{tpu_custom_call.1} parent=1 // pred_region
      %s18 = ssub.s32 128, 128
      %19 = vsyncadd [#allocation3], %s18
      %s20 = sshll.u32 [#allocation2], 4
      %s21 = int_to_ptr.vmem [resolvable:$true] %s20
      %26 = dma.hbm_to_vmem [thread:$0]  %s0, 128, %s21, [#allocation3], 64, 64, 4
    $region5: #{tpu_custom_call.1} parent=1 // pred_fallthru
      _
    // Predicated region
    $region6: #{tpu_custom_call.1} parent=1 // pred_check
      _
    $region7: #{tpu_custom_call.1} parent=1 // pred_check_branch
      %28 = sbr.rel (0) target = $region9
    $region8: #{tpu_custom_call.1} parent=1 // pred_region
      %s30 = ssub.s32 256, 256
      %31 = vsyncadd [#allocation6], %s30
      %s32 = sshll.u32 [#allocation5], 4
      %s33 = int_to_ptr.vmem [resolvable:$true] %s32
      %38 = dma.hbm_to_vmem [thread:$0]  %s1, 256, %s33, [#allocation6], 128, 128, 8
    $region9: #{tpu_custom_call.1} parent=1 // pred_fallthru
      _
    // Predicated region
    $region10: #{tpu_custom_call.1} parent=1 // pred_check
      _
    $region11: #{tpu_custom_call.1} parent=1 // pred_check_branch
      %40 = sbr.rel (0) target = $region13
    $region12: #{tpu_custom_call.1} parent=1 // pred_region
      %s42 = ssub.s32 384, 384
      %43 = vsyncadd [#allocation6], %s42
      %s44 = sshll.u32 [#allocation7], 4
      %s45 = int_to_ptr.vmem [resolvable:$true] %s44
      %50 = dma.hbm_to_vmem [thread:$0]  %s2, 384, %s45, [#allocation6], 192, 192, 12
    $region13: #{tpu_custom_call.1} parent=1 // pred_fallthru
      _
    // Predicated region
    $region14: #{tpu_custom_call.1} parent=1 // pred_check
      _
    $region15: #{tpu_custom_call.1} parent=1 // pred_check_branch
      %52 = sbr.rel (0) target = $region17
    $region16: #{tpu_custom_call.1} parent=1 // pred_region
      %s54 = ssub.s32 3072, 3072
      %55 = vsyncadd [#allocation9], %s54
      %s56 = sshll.u32 [#allocation8], 4
      %s57 = int_to_ptr.vmem [resolvable:$true] %s56
      %62 = dma.hbm_to_vmem [thread:$0]  %s3, 3072, %s57, [#allocation9], 192, 192, 12
    $region17: #{tpu_custom_call.1} parent=1 // pred_fallthru
      _
    // Predicated region
    $region18: #{tpu_custom_call.1} parent=1 // pred_check
      _
    $region19: #{tpu_custom_call.1} parent=1 // pred_check_branch
      %64 = sbr.rel (0) target = $region21
    $region20: #{tpu_custom_call.1} parent=1 // pred_region
      _
    $region21: #{tpu_custom_call.1} parent=1 // pred_fallthru
      _
    // Predicated region
    $region22: #{tpu_custom_call.1} parent=1 // pred_check
      _
    $region23: #{tpu_custom_call.1} parent=1 // pred_check_branch
      %66 = sbr.rel (0) target = $region25
    $region24: #{tpu_custom_call.1} parent=1 // pred_region
      _
    $region25: #{tpu_custom_call.1} parent=1 // pred_fallthru
      _
    // Predicated region
    $region26: #{tpu_custom_call.1} parent=1 // pred_check
      _
    $region27: #{tpu_custom_call.1} parent=1 // pred_check_branch
      %68 = sbr.rel (0) target = $region29
    $region28: #{tpu_custom_call.1} parent=1 // pred_region
      %69 = dma.done [#allocation3], 128
    $region29: #{tpu_custom_call.1} parent=1 // pred_fallthru
      _
    // Predicated region
    $region30: #{tpu_custom_call.1} parent=1 // pred_check
      _
    $region31: #{tpu_custom_call.1} parent=1 // pred_check_branch
      %71 = sbr.rel (0) target = $region33
    $region32: #{tpu_custom_call.1} parent=1 // pred_region
      %72 = dma.done [#allocation6], 256
    $region33: #{tpu_custom_call.1} parent=1 // pred_fallthru
      _
    // Predicated region
    $region34: #{tpu_custom_call.1} parent=1 // pred_check
      _
    $region35: #{tpu_custom_call.1} parent=1 // pred_check_branch
      %74 = sbr.rel (0) target = $region37
    $region36: #{tpu_custom_call.1} parent=1 // pred_region
      %75 = dma.done [#allocation6], 384
    $region37: #{tpu_custom_call.1} parent=1 // pred_fallthru
      _
    // Predicated region
    $region38: #{tpu_custom_call.1} parent=1 // pred_check
      _
    $region39: #{tpu_custom_call.1} parent=1 // pred_check_branch
      %77 = sbr.rel (0) target = $region41
    $region40: #{tpu_custom_call.1} parent=1 // pred_region
      %78 = dma.done [#allocation9], 3072
    $region41: #{tpu_custom_call.1} parent=1 // pred_fallthru
      _
    %v80 = vld [vmem:[#allocation5] sm:$0xff]
    %v81 = vld [vmem:[#allocation5 + $0x8] sm:$0xff]
    %v82 = vld [vmem:[#allocation2] sm:$0xf]
    %v83 = vld [vmem:[#allocation2 + $0x4] sm:$0xf]
    %v84 = vld [vmem:[#allocation7] sm:$0xff]
    %v85 = vld [vmem:[#allocation7 + $0x8] sm:$0xf]
    %v86 = vld [vmem:[#allocation7 + $0xc] sm:$0xff]
    %v87 = vld [vmem:[#allocation7 + $0x14] sm:$0xf]
    %v88 = vld [vmem:[%s4] sm:$0x7]
    %v90 = vlaneseq
    %v91 = vshrl.u32 %v90, 7
    %v92 = vsub.s32 0, %v91
    %v93 = vrot.slane %v88, %v92
    %v94 = vlaneseq
    %v95 = vshrl.u32 %v94, 7
    %v96 = vsub.s32 1, %v95
    %v97 = vrot.slane %v88, %v96
    %v98 = vlaneseq
    %v99 = vshrl.u32 %v98, 7
    %v100 = vsub.s32 2, %v99
    %v101 = vrot.slane %v88, %v100
    %v107 = vunpack.c.l.b16 %v82
    %v108 = vunpack.c.l.b16 %v83
    %v109 = vpack.c.b16 %v108, %v107
    %v114 = vunpack.c.l.b16 %v84
    %v115 = vunpack.c.h.b16 %v84
    %v116 = vunpack.c.l.b16 %v85
    %v117 = vunpack.c.l.b16 %v86
    %v118 = vunpack.c.h.b16 %v86
    %v119 = vunpack.c.l.b16 %v87
    %v120 = vpack.c.b16 %v117, %v114
    %v121 = vpack.c.b16 %v118, %v115
    %v122 = vpack.c.b16 %v119, %v116
    %vm126 = vcmask 130048
    %v128 = vsel %vm126, %v109, 0
    %130 = vmatprep.subr.bf16.mxu0 %v121
    %131 = vmatpush1.bf16.msra.mxu0 %v120
    %132 = vmatprep.subr.bf16.mxu0 0
    %133 = vmatpush1.bf16.msra.mxu0 0
    %134 = vmatprep.subr.bf16.mxu0 0
    %135 = vmatpush1.bf16.msra.mxu0 0
    %136 = vmatprep.subr.bf16.mxu0 0
    %137 = vmatpush1.bf16.msra.mxu0 0
    %138 = vmatprep.subr.bf16.mxu0 0
    %139 = vmatpush1.bf16.msra.mxu0 0
    %140 = vmatprep.subr.bf16.mxu0 0
    %141 = vmatpush1.bf16.msra.mxu0 0
    %142 = vmatprep.subr.bf16.mxu0 0
    %143 = vmatpush1.bf16.msra.mxu0 0
    %144 = vmatprep.subr.bf16.mxu0 0
    %145 = vmatpush1.bf16.msra.mxu0 0
    %146 = vmatprep.subr.bf16.mxu0 0
    %147 = vmatpush1.bf16.msra.mxu0 0
    %148 = vmatprep.subr.bf16.mxu0 0
    %149 = vmatpush1.bf16.msra.mxu0 0
    %150 = vmatprep.subr.bf16.mxu0 0
    %151 = vmatpush1.bf16.msra.mxu0 0
    %152 = vmatprep.subr.bf16.mxu0 0
    %153 = vmatpush1.bf16.msra.mxu0 0
    %154 = vmatprep.subr.bf16.mxu0 0
    %155 = vmatpush1.bf16.msra.mxu0 0
    %156 = vmatprep.subr.bf16.mxu0 0
    %157 = vmatpush1.bf16.msra.mxu0 0
    %158 = vmatprep.subr.bf16.mxu0 0
    %159 = vmatpush1.bf16.msra.mxu0 0
    %160 = vmatprep.subr.bf16.mxu0 0
    %161 = vmatpush1.bf16.msra.mxu0 0
    %162 = vmatprep.mubr.bf16.mxu0 0
    %163 = vmatmul.mubr.bf16.gmra.mrb[0].mxu0 %v128
    %v164 = vpop.f32.mrb[0].mxu0
    %v165 = vadd.f32 %v93, %v164
    %v166 = vpop.f32.mrb[0].mxu0
    %v167 = vadd.f32 %v97, %v166
    %v168 = vpop.f32.mrb[0].mxu0
    %v169 = vadd.f32 %v93, %v168
    %v170 = vpop.f32.mrb[0].mxu0
    %v171 = vadd.f32 %v97, %v170
    %172 = vdwg.mxu0
    %173 = vmatprep.subr.bf16.mxu0 0
    %174 = vmatpush1.bf16.msra.mxu0 %v122
    %175 = vmatprep.subr.bf16.mxu0 0
    %176 = vmatpush1.bf16.msra.mxu0 0
    %177 = vmatprep.subr.bf16.mxu0 0
    %178 = vmatpush1.bf16.msra.mxu0 0
    %179 = vmatprep.subr.bf16.mxu0 0
    %180 = vmatpush1.bf16.msra.mxu0 0
    %181 = vmatprep.subr.bf16.mxu0 0
    %182 = vmatpush1.bf16.msra.mxu0 0
    %183 = vmatprep.subr.bf16.mxu0 0
    %184 = vmatpush1.bf16.msra.mxu0 0
    %185 = vmatprep.subr.bf16.mxu0 0
    %186 = vmatpush1.bf16.msra.mxu0 0
    %187 = vmatprep.subr.bf16.mxu0 0
    %188 = vmatpush1.bf16.msra.mxu0 0
    %189 = vmatprep.subr.bf16.mxu0 0
    %190 = vmatpush1.bf16.msra.mxu0 0
    %191 = vmatprep.subr.bf16.mxu0 0
    %192 = vmatpush1.bf16.msra.mxu0 0
    %193 = vmatprep.subr.bf16.mxu0 0
    %194 = vmatpush1.bf16.msra.mxu0 0
    %195 = vmatprep.subr.bf16.mxu0 0
    %196 = vmatpush1.bf16.msra.mxu0 0
    %197 = vmatprep.subr.bf16.mxu0 0
    %198 = vmatpush1.bf16.msra.mxu0 0
    %199 = vmatprep.subr.bf16.mxu0 0
    %200 = vmatpush1.bf16.msra.mxu0 0
    %201 = vmatprep.subr.bf16.mxu0 0
    %202 = vmatpush1.bf16.msra.mxu0 0
    %203 = vmatprep.subr.bf16.mxu0 0
    %204 = vmatpush1.bf16.msra.mxu0 0
    %205 = vmatprep.mubr.bf16.mxu0 0
    %206 = vmatmul.mubr.bf16.gmra.mrb[0].mxu0 %v128
    %v207 = vpop.f32.mrb[0].mxu0
    %v208 = vadd.f32 %v101, %v207
    %v209 = vpop.f32.mrb[0].mxu0
    %v210 = vpop.f32.mrb[0].mxu0
    %v211 = vadd.f32 %v101, %v210
    %v212 = vpop.f32.mrb[0].mxu0
    %213 = vdwg.mxu0
    %v214 = vpack.c.bf16 %v81, %v80
    %v215 = vld [vmem:[#allocation8] sm:$0xff]
    %v216 = vld [vmem:[#allocation8 + $0x8] sm:$0xf]
    %v217 = vld [vmem:[#allocation8 + $0xc] sm:$0xff]
    %v218 = vld [vmem:[#allocation8 + $0x14] sm:$0xf]
    %v219 = vld [vmem:[#allocation8 + $0x18] sm:$0xff]
    %v220 = vld [vmem:[#allocation8 + $0x20] sm:$0xf]
    %v221 = vld [vmem:[#allocation8 + $0x24] sm:$0xff]
    %v222 = vld [vmem:[#allocation8 + $0x2c] sm:$0xf]
    %v223 = vld [vmem:[#allocation8 + $0x30] sm:$0xff]
    %v224 = vld [vmem:[#allocation8 + $0x38] sm:$0xf]
    %v225 = vld [vmem:[#allocation8 + $0x3c] sm:$0xff]
    %v226 = vld [vmem:[#allocation8 + $0x44] sm:$0xf]
    %v227 = vld [vmem:[#allocation8 + $0x48] sm:$0xff]
    %v228 = vld [vmem:[#allocation8 + $0x50] sm:$0xf]
    %v229 = vld [vmem:[#allocation8 + $0x54] sm:$0xff]
    %v230 = vld [vmem:[#allocation8 + $0x5c] sm:$0xf]
    %v231 = vld [vmem:[#allocation8 + $0x60] sm:$0xff]
    %v232 = vld [vmem:[#allocation8 + $0x68] sm:$0xf]
    %v233 = vld [vmem:[#allocation8 + $0x6c] sm:$0xff]
    %v234 = vld [vmem:[#allocation8 + $0x74] sm:$0xf]
    %v235 = vld [vmem:[#allocation8 + $0x78] sm:$0xff]
    %v236 = vld [vmem:[#allocation8 + $0x80] sm:$0xf]
    %v237 = vld [vmem:[#allocation8 + $0x84] sm:$0xff]
    %v238 = vld [vmem:[#allocation8 + $0x8c] sm:$0xf]
    %v239 = vld [vmem:[#allocation8 + $0x90] sm:$0xff]
    %v240 = vld [vmem:[#allocation8 + $0x98] sm:$0xf]
    %v241 = vld [vmem:[#allocation8 + $0x9c] sm:$0xff]
    %v242 = vld [vmem:[#allocation8 + $0xa4] sm:$0xf]
    %v243 = vld [vmem:[#allocation8 + $0xa8] sm:$0xff]
    %v244 = vld [vmem:[#allocation8 + $0xb0] sm:$0xf]
    %v245 = vld [vmem:[#allocation8 + $0xb4] sm:$0xff]
    %v246 = vld [vmem:[#allocation8 + $0xbc] sm:$0xf]
    %v247 = vld [vmem:[%s5] sm:$0x7]
    %v249 = vlaneseq
    %v250 = vshrl.u32 %v249, 7
    %v251 = vsub.s32 0, %v250
    %v252 = vrot.slane %v247, %v251
    %v253 = vlaneseq
    %v254 = vshrl.u32 %v253, 7
    %v255 = vsub.s32 1, %v254
    %v256 = vrot.slane %v247, %v255
    %v257 = vlaneseq
    %v258 = vshrl.u32 %v257, 7
    %v259 = vsub.s32 2, %v258
    %v260 = vrot.slane %v247, %v259
    %v296 = vunpack.c.l.b16 %v215
    %v297 = vunpack.c.h.b16 %v215
    %v298 = vunpack.c.l.b16 %v216
    %v299 = vunpack.c.l.b16 %v217
    %v300 = vunpack.c.h.b16 %v217
    %v301 = vunpack.c.l.b16 %v218
    %v302 = vunpack.c.l.b16 %v219
    %v303 = vunpack.c.h.b16 %v219
    %v304 = vunpack.c.l.b16 %v220
    %v305 = vunpack.c.l.b16 %v221
    %v306 = vunpack.c.h.b16 %v221
    %v307 = vunpack.c.l.b16 %v222
    %v308 = vunpack.c.l.b16 %v223
    %v309 = vunpack.c.h.b16 %v223
    %v310 = vunpack.c.l.b16 %v224
    %v311 = vunpack.c.l.b16 %v225
    %v312 = vunpack.c.h.b16 %v225
    %v313 = vunpack.c.l.b16 %v226
    %v314 = vunpack.c.l.b16 %v227
    %v315 = vunpack.c.h.b16 %v227
    %v316 = vunpack.c.l.b16 %v228
    %v317 = vunpack.c.l.b16 %v229
    %v318 = vunpack.c.h.b16 %v229
    %v319 = vunpack.c.l.b16 %v230
    %v320 = vunpack.c.l.b16 %v231
    %v321 = vunpack.c.h.b16 %v231
    %v322 = vunpack.c.l.b16 %v232
    %v323 = vunpack.c.l.b16 %v233
    %v324 = vunpack.c.h.b16 %v233
    %v325 = vunpack.c.l.b16 %v234
    %v326 = vunpack.c.l.b16 %v235
    %v327 = vunpack.c.h.b16 %v235
    %v328 = vunpack.c.l.b16 %v236
    %v329 = vunpack.c.l.b16 %v237
    %v330 = vunpack.c.h.b16 %v237
    %v331 = vunpack.c.l.b16 %v238
    %v332 = vunpack.c.l.b16 %v239
    %v333 = vunpack.c.h.b16 %v239
    %v334 = vunpack.c.l.b16 %v240
    %v335 = vunpack.c.l.b16 %v241
    %v336 = vunpack.c.h.b16 %v241
    %v337 = vunpack.c.l.b16 %v242
    %v338 = vunpack.c.l.b16 %v243
    %v339 = vunpack.c.h.b16 %v243
    %v340 = vunpack.c.l.b16 %v244
    %v341 = vunpack.c.l.b16 %v245
    %v342 = vunpack.c.h.b16 %v245
    %v343 = vunpack.c.l.b16 %v246
    %v344 = vpack.c.b16 %v299, %v296
    %v345 = vpack.c.b16 %v300, %v297
    %v346 = vpack.c.b16 %v301, %v298
    %v347 = vpack.c.b16 %v305, %v302
    %v348 = vpack.c.b16 %v306, %v303
    %v349 = vpack.c.b16 %v307, %v304
    %v350 = vpack.c.b16 %v311, %v308
    %v351 = vpack.c.b16 %v312, %v309
    %v352 = vpack.c.b16 %v313, %v310
    %v353 = vpack.c.b16 %v317, %v314
    %v354 = vpack.c.b16 %v318, %v315
    %v355 = vpack.c.b16 %v319, %v316
    %v356 = vpack.c.b16 %v323, %v320
    %v357 = vpack.c.b16 %v324, %v321
    %v358 = vpack.c.b16 %v325, %v322
    %v359 = vpack.c.b16 %v329, %v326
    %v360 = vpack.c.b16 %v330, %v327
    %v361 = vpack.c.b16 %v331, %v328
    %v362 = vpack.c.b16 %v335, %v332
    %v363 = vpack.c.b16 %v336, %v333
    %v364 = vpack.c.b16 %v337, %v334
    %v365 = vpack.c.b16 %v341, %v338
    %v366 = vpack.c.b16 %v342, %v339
    %v367 = vpack.c.b16 %v343, %v340
    %392 = vmatprep.subr.bf16.mxu0 %v345
    %393 = vmatpush1.bf16.msra.mxu0 %v344
    %394 = vmatprep.subr.bf16.mxu0 %v348
    %395 = vmatpush1.bf16.msra.mxu0 %v347
    %396 = vmatprep.subr.bf16.mxu0 %v351
    %397 = vmatpush1.bf16.msra.mxu0 %v350
    %398 = vmatprep.subr.bf16.mxu0 %v354
    %399 = vmatpush1.bf16.msra.mxu0 %v353
    %400 = vmatprep.subr.bf16.mxu0 %v357
    %401 = vmatpush1.bf16.msra.mxu0 %v356
    %402 = vmatprep.subr.bf16.mxu0 %v360
    %403 = vmatpush1.bf16.msra.mxu0 %v359
    %404 = vmatprep.subr.bf16.mxu0 %v363
    %405 = vmatpush1.bf16.msra.mxu0 %v362
    %406 = vmatprep.subr.bf16.mxu0 %v366
    %407 = vmatpush1.bf16.msra.mxu0 %v365
    %408 = vmatprep.subr.bf16.mxu0 0
    %409 = vmatpush1.bf16.msra.mxu0 0
    %410 = vmatprep.subr.bf16.mxu0 0
    %411 = vmatpush1.bf16.msra.mxu0 0
    %412 = vmatprep.subr.bf16.mxu0 0
    %413 = vmatpush1.bf16.msra.mxu0 0
    %414 = vmatprep.subr.bf16.mxu0 0
    %415 = vmatpush1.bf16.msra.mxu0 0
    %416 = vmatprep.subr.bf16.mxu0 0
    %417 = vmatpush1.bf16.msra.mxu0 0
    %418 = vmatprep.subr.bf16.mxu0 0
    %419 = vmatpush1.bf16.msra.mxu0 0
    %420 = vmatprep.subr.bf16.mxu0 0
    %421 = vmatpush1.bf16.msra.mxu0 0
    %422 = vmatprep.subr.bf16.mxu0 0
    %423 = vmatpush1.bf16.msra.mxu0 0
    %424 = vmatprep.mubr.bf16.mxu0 0
    %425 = vmatmul.mubr.bf16.gmra.mrb[0].mxu0 %v214
    %v426 = vpop.f32.mrb[0].mxu0
    %v427 = vadd.f32 %v252, %v426
    %v428 = vpop.f32.mrb[0].mxu0
    %v429 = vadd.f32 %v256, %v428
    %v430 = vpop.f32.mrb[0].mxu0
    %v431 = vadd.f32 %v252, %v430
    %v432 = vpop.f32.mrb[0].mxu0
    %v433 = vadd.f32 %v256, %v432
    %434 = vdwg.mxu0
    %435 = vmatprep.subr.bf16.mxu0 0
    %436 = vmatpush1.bf16.msra.mxu0 %v346
    %437 = vmatprep.subr.bf16.mxu0 0
    %438 = vmatpush1.bf16.msra.mxu0 %v349
    %439 = vmatprep.subr.bf16.mxu0 0
    %440 = vmatpush1.bf16.msra.mxu0 %v352
    %441 = vmatprep.subr.bf16.mxu0 0
    %442 = vmatpush1.bf16.msra.mxu0 %v355
    %443 = vmatprep.subr.bf16.mxu0 0
    %444 = vmatpush1.bf16.msra.mxu0 %v358
    %445 = vmatprep.subr.bf16.mxu0 0
    %446 = vmatpush1.bf16.msra.mxu0 %v361
    %447 = vmatprep.subr.bf16.mxu0 0
    %448 = vmatpush1.bf16.msra.mxu0 %v364
    %449 = vmatprep.subr.bf16.mxu0 0
    %450 = vmatpush1.bf16.msra.mxu0 %v367
    %451 = vmatprep.subr.bf16.mxu0 0
    %452 = vmatpush1.bf16.msra.mxu0 0
    %453 = vmatprep.subr.bf16.mxu0 0
    %454 = vmatpush1.bf16.msra.mxu0 0
    %455 = vmatprep.subr.bf16.mxu0 0
    %456 = vmatpush1.bf16.msra.mxu0 0
    %457 = vmatprep.subr.bf16.mxu0 0
    %458 = vmatpush1.bf16.msra.mxu0 0
    %459 = vmatprep.subr.bf16.mxu0 0
    %460 = vmatpush1.bf16.msra.mxu0 0
    %461 = vmatprep.subr.bf16.mxu0 0
    %462 = vmatpush1.bf16.msra.mxu0 0
    %463 = vmatprep.subr.bf16.mxu0 0
    %464 = vmatpush1.bf16.msra.mxu0 0
    %465 = vmatprep.subr.bf16.mxu0 0
    %466 = vmatpush1.bf16.msra.mxu0 0
    %467 = vmatprep.mubr.bf16.mxu0 0
    %468 = vmatmul.mubr.bf16.gmra.mrb[0].mxu0 %v214
    %v469 = vpop.f32.mrb[0].mxu0
    %v470 = vadd.f32 %v260, %v469
    %v471 = vpop.f32.mrb[0].mxu0
    %v472 = vpop.f32.mrb[0].mxu0
    %v473 = vadd.f32 %v260, %v472
    %v474 = vpop.f32.mrb[0].mxu0
    %475 = vdwg.mxu0
    %v476 = vadd.f32 %v165, %v427
    %v477 = vadd.f32 %v169, %v431
    %v478 = vmul.f32 %v476, 0.5
    %v479 = vmul.f32 %v477, 0.5
    %v480 = vtanh.pop %v478
    %v481 = vtanh.pop %v479
    %v482 = vadd.f32 %v480, 1.0
    %v483 = vadd.f32 %v481, 1.0
    %v484 = vmul.f32 %v482, 0.5
    %v485 = vmul.f32 %v483, 0.5
    %v486 = vadd.f32 %v167, %v429
    %v487 = vadd.f32 %v171, %v433
    %v488 = vmul.f32 %v486, 0.5
    %v489 = vmul.f32 %v487, 0.5
    %v490 = vtanh.pop %v488
    %v491 = vtanh.pop %v489
    %v492 = vadd.f32 %v490, 1.0
    %v493 = vadd.f32 %v491, 1.0
    %v494 = vmul.f32 %v492, 0.5
    %v495 = vmul.f32 %v493, 0.5
    %v496 = vmul.f32 %v484, %v470
    %v497 = vmul.f32 %v485, %v473
    %v498 = vadd.f32 %v496, %v208
    %v499 = vadd.f32 %v497, %v211
    %v500 = vtanh.pop %v498
    %v501 = vtanh.pop %v499
    %v502 = vsub.f32 %v80, %v500
    %v503 = vsub.f32 %v81, %v501
    %v504 = vmul.f32 %v494, %v502
    %v505 = vmul.f32 %v495, %v503
    %v506 = vadd.f32 %v500, %v504
    %v507 = vadd.f32 %v501, %v505
    %508 = vst [vmem:[#allocation10] sm:$0xff] %v506
    %509 = vst [vmem:[#allocation10 + $0x8] sm:$0xff] %v507
    // Predicated region
    $region42: #{tpu_custom_call.1} parent=1 // pred_check
      _
    $region43: #{tpu_custom_call.1} parent=1 // pred_check_branch
      %511 = sbr.rel (0) target = $region45
    $region44: #{tpu_custom_call.1} parent=1 // pred_region
      %s513 = ssub.s32 256, 256
      %514 = vsyncadd [#allocation4], %s513
      %s515 = sshll.u32 [#allocation10], 4
      %s516 = int_to_ptr.vmem [resolvable:$true] %s515
      %521 = dma.vmem_to_hbm [thread:$0]  %s516, 256, %s6, [#allocation4], 128, 128, 8
    $region45: #{tpu_custom_call.1} parent=1 // pred_fallthru
      _
    // Predicated region
    $region46: #{tpu_custom_call.1} parent=1 // pred_check
      _
    $region47: #{tpu_custom_call.1} parent=1 // pred_check_branch
      %523 = sbr.rel (0) target = $region49
    $region48: #{tpu_custom_call.1} parent=1 // pred_region
      %524 = dma.done [#allocation4], 256
    $region49: #{tpu_custom_call.1} parent=1 // pred_fallthru
      _
    %525 = vsyncpa [#allocation3], 1
    %526 = vsyncpa [#allocation6], 1
    %527 = vsyncpa [#allocation9], 1
    %528 = vsyncpa [#allocation4], 1

</llo_original>
